<compile_context>
chip_gen: v7x
topology: tpu7x:2x2x1
jax: 0.10.0
libtpu: 0.0.40
codegen_flags: <defaults>
</compile_context>

<pallas_src>
import jax
import jax.numpy as jnp
from jax.experimental import pallas as pl
from jax.experimental.pallas import tpu as pltpu

EPS = 1e-5


def _round_up(x, m):
    return (x + m - 1) // m * m


def _vmem_limit(nbytes):
    # Explicit scoped-VMEM request: at least v5e's 16 MiB scoped default (the
    # smallest of the three generations), at most ~48 MiB so the same kernel
    # still fits v7x's 64 MiB physical VMEM with headroom.  The 2x factor
    # covers the pipeline's double-buffering.
    return int(min(max(2 * nbytes, 16 * 1024 * 1024), 48 * 1024 * 1024))


# ---------------------------------------------------------------------------
# Kernel 1: encode = LayerNorm(node_features) -> Linear(F -> D), bf16 output.
# (LN gamma/beta pre-folded into w/b in the wrapper; only mean/var in-kernel)
# ---------------------------------------------------------------------------
def encode_kernel(x_ref, w_ref, b_ref, z_ref):
    x = x_ref[...].astype(jnp.float32)                        # (tile_n, F)
    mean = jnp.mean(x, axis=-1, keepdims=True)
    var = jnp.mean((x - mean) ** 2, axis=-1, keepdims=True)
    xn = (x - mean) * jax.lax.rsqrt(var + EPS)
    z = jnp.dot(xn, w_ref[...], preferred_element_type=jnp.float32) + b_ref[...]
    z_ref[...] = z.astype(z_ref.dtype)                        # bf16 writeback


def encode(x, ln_gamma, ln_beta, w_enc, b_enc, *, tile_n=2048):
    """Returns z padded to a multiple of tile_n rows, in bfloat16.
    Padded rows are junk and are never indexed by decode()."""
    N, F = x.shape
    D = w_enc.shape[1]

    # Fold LayerNorm affine into the projection:
    #   LN(x) @ W + b == xn @ (gamma[:,None]*W) + (beta @ W + b)
    w_f = (ln_gamma[:, None] * w_enc).astype(jnp.float32)
    b_f = (ln_beta @ w_enc + b_enc).reshape(1, D).astype(jnp.float32)

    tile_n = max(16, min(_round_up(tile_n, 16), _round_up(N, 16)))
    n_pad = _round_up(N, tile_n)
    if n_pad != N:
        x = jnp.pad(x, ((0, n_pad - N), (0, 0)))

    need = 4 * (tile_n * F + F * D + D) + 2 * tile_n * D
    return pl.pallas_call(
        encode_kernel,
        out_shape=jax.ShapeDtypeStruct((n_pad, D), jnp.bfloat16),
        grid_spec=pltpu.PrefetchScalarGridSpec(
            num_scalar_prefetch=0,
            grid=(n_pad // tile_n,),
            in_specs=[
                pl.BlockSpec((tile_n, F), lambda i: (i, 0)),
                pl.BlockSpec((F, D), lambda i: (0, 0)),
                pl.BlockSpec((1, D), lambda i: (0, 0)),
            ],
            out_specs=pl.BlockSpec((tile_n, D), lambda i: (i, 0)),
        ),
        compiler_params=pltpu.CompilerParams(
            dimension_semantics=("parallel",),
            vmem_limit_bytes=_vmem_limit(need),
        ),
        cost_estimate=pl.CostEstimate(
            flops=2 * n_pad * F * D + 8 * n_pad * F,
            transcendentals=n_pad,
            bytes_accessed=4 * (n_pad * F + F * D + D) + 2 * n_pad * D,
        ),
    )(x, w_f, b_f)


# ---------------------------------------------------------------------------
# Kernel 2: decode MLP head; BNs folded, concat eliminated via split weights:
#   out = ReLU(z[src] @ W1s + z[dst] @ W1d + b1f) @ W2 + b2
# Preferred path keeps z resident in VMEM and gathers rows in-kernel.
# Output is the true (E, 2) logits (8 B/edge writeback).
# ---------------------------------------------------------------------------
def _mlp_head(src, dst, w1s, w1d, b1, w2, b2):
    h = jnp.dot(src, w1s, preferred_element_type=jnp.float32)
    h = h + jnp.dot(dst, w1d, preferred_element_type=jnp.float32)
    h = jnp.maximum(h + b1, 0.0)          # ReLU; Dropout(0.5) identity in eval
    return jnp.dot(h, w2, preferred_element_type=jnp.float32) + b2


def decode_fused_kernel(idx_ref, z_ref, w1s_ref, w1d_ref, b1_ref, w2_ref, b2_ref,
                        out_ref):
    # z is resident in VMEM (constant-index full block across the edge grid).
    # Cast once per step (cheap, VALU has slack) so the row gather runs in f32.
    z = z_ref[...].astype(jnp.float32)                        # (n_pad, D)
    src = jnp.take(z, idx_ref[0, :], axis=0, mode="promise_in_bounds")
    dst = jnp.take(z, idx_ref[1, :], axis=0, mode="promise_in_bounds")
    out = _mlp_head(src, dst, w1s_ref[...], w1d_ref[...], b1_ref[...],
                    w2_ref[...], b2_ref[...])
    out_ref[...] = out.astype(out_ref.dtype)


def decode_gathered_kernel(src_ref, dst_ref, w1s_ref, w1d_ref, b1_ref, w2_ref,
                           b2_ref, out_ref):
    out = _mlp_head(src_ref[...].astype(jnp.float32),
                    dst_ref[...].astype(jnp.float32),
                    w1s_ref[...], w1d_ref[...], b1_ref[...],
                    w2_ref[...], b2_ref[...])
    out_ref[...] = out.astype(out_ref.dtype)


def decode(z, edge_label_index, p, *, tile_e=4096):
    n_pad, D = z.shape
    E = edge_label_index.shape[1]
    H = p["w1"].shape[1]

    # ---- fold eval-mode BatchNorms into Linear1.  Module order is
    # BN1 -> Linear1 -> BN2 -> ReLU, so folding BN2 *before* the ReLU is exact.
    mu1, var1, g1, be1 = p["bn1"]
    mu2, var2, g2, be2 = p["bn2"]
    s1 = g1 * jax.lax.rsqrt(var1 + EPS)
    t1 = be1 - mu1 * s1
    s2 = g2 * jax.lax.rsqrt(var2 + EPS)
    t2 = be2 - mu2 * s2
    w1f = (s1[:, None] * p["w1"]) * s2[None, :]                # (2D, H)
    b1f = ((t1 @ p["w1"] + p["b1"]) * s2 + t2).reshape(1, H).astype(jnp.float32)
    w1_src = w1f[:D].astype(jnp.float32)                       # (D, H)
    w1_dst = w1f[D:].astype(jnp.float32)                       # (D, H)
    w2 = p["w2"].astype(jnp.float32)                           # (H, 2)
    b2 = p["b2"].reshape(1, 2).astype(jnp.float32)

    # ---- edge tiling: lane multiples of 128; once E is large, cap the tile so
    # the grid has >=2 steps and v7x's two TensorCores both get work
    # (no-op on the single-TC v5e/v6e). ----
    tile_e = _round_up(max(tile_e, 128), 128)
    tile_e = min(tile_e, _round_up(E, 128))
    if E >= 2048:
        tile_e = min(tile_e, _round_up(pl.cdiv(E, 2), 128))
    e_pad = _round_up(E, tile_e)
    idx = edge_label_index.astype(jnp.int32)
    if e_pad != E:
        idx = jnp.pad(idx, ((0, 0), (0, e_pad - E)))           # pad with node 0

    grid = (e_pad // tile_e,)
    weight_specs = [
        pl.BlockSpec((D, H), lambda i: (0, 0)),
        pl.BlockSpec((D, H), lambda i: (0, 0)),
        pl.BlockSpec((1, H), lambda i: (0, 0)),
        pl.BlockSpec((H, 2), lambda i: (0, 0)),
        pl.BlockSpec((1, 2), lambda i: (0, 0)),
    ]
    weights = (w1_src, w1_dst, b1f, w2, b2)
    # Narrow (e_pad, 2) output: 8 B/edge writeback instead of 512 B/edge for a
    # padded 128-lane f32 head.  The 2-lane masked store is tiny; HBM DMA bytes
    # (not store slots) are the binding resource here.
    out_shape = jax.ShapeDtypeStruct((e_pad, 2), jnp.float32)
    out_spec = pl.BlockSpec((tile_e, 2), lambda i: (i, 0))
    w_bytes = 4 * (2 * D * H + H + 2 * H + 2)
    flops = 4 * e_pad * H * (D + 1)

    # ---- preferred path: z resident in VMEM, row gather fused in-kernel ----
    z_res_bytes = z.size * z.dtype.itemsize
    fused_need = 2 * z_res_bytes + 2 * (2 * tile_e * 4 + tile_e * 2 * 4) + w_bytes
    if fused_need <= 44 * 1024 * 1024:
        try:
            out = pl.pallas_call(
                decode_fused_kernel,
                out_shape=out_shape,
                grid_spec=pltpu.PrefetchScalarGridSpec(
                    num_scalar_prefetch=0,
                    grid=grid,
                    in_specs=[
                        pl.BlockSpec((2, tile_e), lambda i: (0, i)),   # edge ids
                        pl.BlockSpec((n_pad, D), lambda i: (0, 0)),    # resident z
                    ] + weight_specs,
                    out_specs=out_spec,
                ),
                compiler_params=pltpu.CompilerParams(
                    dimension_semantics=("parallel",),
                    vmem_limit_bytes=_vmem_limit(fused_need),
                ),
                cost_estimate=pl.CostEstimate(
                    flops=flops, transcendentals=0,
                    bytes_accessed=2 * e_pad * 4 + z_res_bytes + w_bytes + e_pad * 8,
                ),
            )(idx, z, *weights)
            return out[:E]
        except Exception:
            # In-kernel vector gather not supported by this toolchain (or other
            # lowering issue): fall back to the XLA-side gather below —
            # numerically identical, just one extra HBM round trip.
            pass

    # ---- fallback: XLA-side row gather (bf16 z halves the round-trip bytes) ----
    # TODO(synk): for graphs whose z exceeds the VMEM budget, replace this with
    # a manual DMA row-gather (z in pl.ANY + make_async_copy double buffer).
    src = jnp.take(z, idx[0], axis=0)                          # (e_pad, D) bf16
    dst = jnp.take(z, idx[1], axis=0)                          # (e_pad, D) bf16
    gathered_need = 2 * (2 * tile_e * D * 2 + tile_e * 2 * 4) + w_bytes
    out = pl.pallas_call(
        decode_gathered_kernel,
        out_shape=out_shape,
        grid_spec=pltpu.PrefetchScalarGridSpec(
            num_scalar_prefetch=0,
            grid=grid,
            in_specs=[
                pl.BlockSpec((tile_e, D), lambda i: (i, 0)),
                pl.BlockSpec((tile_e, D), lambda i: (i, 0)),
            ] + weight_specs,
            out_specs=out_spec,
        ),
        compiler_params=pltpu.CompilerParams(
            dimension_semantics=("parallel",),
            vmem_limit_bytes=_vmem_limit(gathered_need),
        ),
        cost_estimate=pl.CostEstimate(
            flops=flops, transcendentals=0,
            bytes_accessed=2 * e_pad * D * 2 + w_bytes + e_pad * 8,
        ),
    )(src, dst, *weights)
    return out[:E]


# ---------------------------------------------------------------------------
# Parameter init (deterministic; mirrors the module's __init__ / init()).
# Linear weights stored (in, out); BN tuples = (running_mean, running_var, gamma, beta)
# ---------------------------------------------------------------------------
def init_params(key, F, D, H=32):
    ks = jax.random.split(key, 3)
    twoD = 2 * D
    return {
        # LayerNorm(node_features.shape[1])
        "ln_gamma": jnp.ones((F,), jnp.float32),
        "ln_beta": jnp.zeros((F,), jnp.float32),
        # FastGTNs stand-in: Linear(F -> D)  (std=0.01 as in self.init())
        "w_enc": 0.01 * jax.random.normal(ks[0], (F, D), jnp.float32),
        "b_enc": jnp.zeros((D,), jnp.float32),
        # self.w head
        "bn1": (jnp.zeros((twoD,), jnp.float32), jnp.ones((twoD,), jnp.float32),
                jnp.ones((twoD,), jnp.float32), jnp.zeros((twoD,), jnp.float32)),
        "w1": 0.01 * jax.random.normal(ks[1], (twoD, H), jnp.float32),
        "b1": jnp.zeros((H,), jnp.float32),
        "bn2": (jnp.zeros((H,), jnp.float32), jnp.ones((H,), jnp.float32),
                jnp.ones((H,), jnp.float32), jnp.zeros((H,), jnp.float32)),
        "w2": 0.01 * jax.random.normal(ks[2], (H, 2), jnp.float32),
        "b2": jnp.zeros((2,), jnp.float32),
    }


def forward(node_features, edge_label_index, p):
    # Kept eager (un-jitted) so the fused-gather pallas_call compiles inside
    # decode()'s try block and can fall back gracefully if unsupported.
    z = encode(node_features, p["ln_gamma"], p["ln_beta"], p["w_enc"], p["b_enc"])
    return decode(z, edge_label_index, p)


def reference_forward(x, idx, p):
    """Pure-JAX eval-mode reference (z quantized to bf16 like the kernel path)."""
    mean = x.mean(-1, keepdims=True)
    var = ((x - mean) ** 2).mean(-1, keepdims=True)
    xln = (x - mean) * jax.lax.rsqrt(var + EPS) * p["ln_gamma"] + p["ln_beta"]
    z = (xln @ p["w_enc"] + p["b_enc"]).astype(jnp.bfloat16).astype(jnp.float32)
    c = jnp.concatenate([z[idx[0]], z[idx[1]]], axis=-1)
    mu1, var1, g1, be1 = p["bn1"]
    c = (c - mu1) * jax.lax.rsqrt(var1 + EPS) * g1 + be1
    h = c @ p["w1"] + p["b1"]
    mu2, var2, g2, be2 = p["bn2"]
    h = (h - mu2) * jax.lax.rsqrt(var2 + EPS) * g2 + be2
    h = jnp.maximum(h, 0.0)               # Dropout(0.5) identity in eval
    return h @ p["w2"] + p["b2"]


if __name__ == "__main__":
    # Small synthetic shapes: num_nodes=64, feat_dim=16, node_dim=32, edges=8
    N, F, D, E = 64, 16, 32, 8
    key = jax.random.PRNGKey(0)
    k_feat, k_edge, k_param = jax.random.split(key, 3)

    node_features = jax.random.normal(k_feat, (N, F), jnp.float32)
    edge_label_index = jax.random.randint(k_edge, (2, E), 0, N, dtype=jnp.int32)
    params = init_params(k_param, F, D)

    out = forward(node_features, edge_label_index, params)
    out = jax.block_until_ready(out)
    assert out.shape == (E, 2) and out.dtype == jnp.float32

    ref = reference_forward(node_features, edge_label_index, params)
    assert jnp.allclose(out, ref, rtol=1e-2, atol=3e-6), (out, ref)
    print("KERNEL_OK")
</pallas_src>

<mosaic_0001>
module attributes {stable_mosaic.version = 11 : i64} {
  func.func @encode_kernel(%arg0: i32, %arg1: memref<64x16xf32, #tpu.memory_space<vmem>>, %arg2: memref<16x32xf32, #tpu.memory_space<vmem>>, %arg3: memref<1x32xf32, #tpu.memory_space<vmem>>, %arg4: memref<64x32xbf16, #tpu.memory_space<vmem>>) attributes {dimension_semantics = [#tpu.dimension_semantics<parallel>], iteration_bounds = array<i64: 1>, scalar_prefetch = 0 : i64, scratch_operands = 0 : i64, tpu.core_type = #tpu.core_type<tc>, window_params = [{transform_indices = @transform_0, window_bounds = array<i64: 64, 16>}, {pipeline_mode = #tpu.pipeline_mode<synchronous>, transform_indices = @transform_1, window_bounds = array<i64: 16, 32>}, {pipeline_mode = #tpu.pipeline_mode<synchronous>, transform_indices = @transform_2, window_bounds = array<i64: 1, 32>}, {transform_indices = @transform_3, window_bounds = array<i64: 64, 32>}]} {
    %c0 = arith.constant 0 : index
    %c0_0 = arith.constant 0 : index
    %0 = vector.load %arg1[%c0, %c0_0] : memref<64x16xf32, #tpu.memory_space<vmem>>, vector<64x16xf32>
    %cst = arith.constant dense<0.000000e+00> : vector<64xf32>
    %1 = vector.multi_reduction <add>, %0, %cst [1] : vector<64x16xf32> to vector<64xf32>
    %2 = vector.shape_cast %1 : vector<64xf32> to vector<64x1xf32>
    %cst_1 = arith.constant 1.600000e+01 : f32
    %3 = vector.broadcast %cst_1 : f32 to vector<64x1xf32>
    %4 = arith.divf %2, %3 : vector<64x1xf32>
    %5 = vector.broadcast %4 : vector<64x1xf32> to vector<64x16xf32>
    %6 = arith.subf %0, %5 : vector<64x16xf32>
    %7 = arith.mulf %6, %6 : vector<64x16xf32>
    %cst_2 = arith.constant dense<0.000000e+00> : vector<64xf32>
    %8 = vector.multi_reduction <add>, %7, %cst_2 [1] : vector<64x16xf32> to vector<64xf32>
    %9 = vector.shape_cast %8 : vector<64xf32> to vector<64x1xf32>
    %cst_3 = arith.constant 1.600000e+01 : f32
    %10 = vector.broadcast %cst_3 : f32 to vector<64x1xf32>
    %11 = arith.divf %9, %10 : vector<64x1xf32>
    %12 = vector.broadcast %4 : vector<64x1xf32> to vector<64x16xf32>
    %13 = arith.subf %0, %12 : vector<64x16xf32>
    %cst_4 = arith.constant 9.99999974E-6 : f32
    %14 = vector.broadcast %cst_4 : f32 to vector<64x1xf32>
    %15 = arith.addf %11, %14 : vector<64x1xf32>
    %16 = math.rsqrt %15 : vector<64x1xf32>
    %17 = vector.broadcast %16 : vector<64x1xf32> to vector<64x16xf32>
    %18 = arith.mulf %13, %17 : vector<64x16xf32>
    %c0_5 = arith.constant 0 : index
    %c0_6 = arith.constant 0 : index
    %19 = vector.load %arg2[%c0_5, %c0_6] : memref<16x32xf32, #tpu.memory_space<vmem>>, vector<16x32xf32>
    %cst_7 = arith.constant dense<0.000000e+00> : vector<64x32xf32>
    %20 = tpu.matmul %18, %19, %cst_7 {dimension_numbers = #tpu.dot_dimension_numbers<[1], [0], [0], [1], [0, 0, 1, 1], [], []>} : vector<64x16xf32>, vector<16x32xf32>, vector<64x32xf32> -> vector<64x32xf32>
    %c0_8 = arith.constant 0 : index
    %c0_9 = arith.constant 0 : index
    %21 = vector.load %arg3[%c0_8, %c0_9] : memref<1x32xf32, #tpu.memory_space<vmem>>, vector<1x32xf32>
    %22 = vector.broadcast %21 : vector<1x32xf32> to vector<64x32xf32>
    %23 = arith.addf %20, %22 : vector<64x32xf32>
    %24 = arith.truncf %23 : vector<64x32xf32> to vector<64x32xbf16>
    %c0_10 = arith.constant 0 : index
    %c0_11 = arith.constant 0 : index
    %25 = vector.load %arg4[%c0_10, %c0_11] : memref<64x32xbf16, #tpu.memory_space<vmem>>, vector<64x32xbf16>
    tpu.vector_store %arg4[%c0_10, %c0_11], %24 {strides = array<i32>} : memref<64x32xbf16, #tpu.memory_space<vmem>>, vector<64x32xbf16>,
    return
  }
  func.func @transform_0(%arg0: i32) -> (i32, i32) {
    %c0_i32 = arith.constant 0 : i32
    %c0_i32_0 = arith.constant 0 : i32
    return %arg0, %c0_i32 : i32, i32
  }
  func.func @transform_1(%arg0: i32) -> (i32, i32) {
    %c0_i32 = arith.constant 0 : i32
    %c0_i32_0 = arith.constant 0 : i32
    %c0_i32_1 = arith.constant 0 : i32
    return %c0_i32, %c0_i32_0 : i32, i32
  }
  func.func @transform_2(%arg0: i32) -> (i32, i32) {
    %c0_i32 = arith.constant 0 : i32
    %c0_i32_0 = arith.constant 0 : i32
    %c0_i32_1 = arith.constant 0 : i32
    return %c0_i32, %c0_i32_0 : i32, i32
  }
  func.func @transform_3(%arg0: i32) -> (i32, i32) {
    %c0_i32 = arith.constant 0 : i32
    %c0_i32_0 = arith.constant 0 : i32
    return %arg0, %c0_i32 : i32, i32
  }
}

</mosaic_0001>

<llo_original>
// kernel: tpu_custom_call.1
$region0: #{tpu_custom_call.1}
  #allocation0 [shape = 'u32[]', space=smem, size = 0x4, offset = 0x4, fixed_abs, tag = 'smem constant byte address 0x4 - core index']
  #allocation1 [shape = 'u32[144,128]{1,0:T(1,128)}', space=vmem, size = 0x12000, scoped, tag = 'internal scratch']
  %s0 = inlined_call_operand.vmem [shape: f32[64,16], index: 0, kind: input, shape index: {}]
  %s1 = inlined_call_operand.vmem [shape: f32[16,32], index: 1, kind: input, shape index: {}]
  %s2 = inlined_call_operand.vmem [shape: f32[1,32], index: 2, kind: input, shape index: {}]
  %s3 = inlined_call_operand.vmem [shape: bf16[64,32], index: 3, kind: output, shape index: {}]
  %s4 = sld [smem:[#allocation0]]
  $region22: #{tpu_custom_call.1} parent=0
    _
  %s6 = ssub.s32 1, %s4
  %s7 = scalar_select 0, %s6, %s4
  // Predicated region
  $region2: #{tpu_custom_call.1} parent=0 // pred_check
    _
  $region3: #{tpu_custom_call.1} parent=0 // pred_check_branch
    %9 = sbr.rel (0) target = $region5
  $region4: #{tpu_custom_call.1} parent=0 // pred_region
    _
  $region5: #{tpu_custom_call.1} parent=0 // pred_fallthru
    _
  // Predicated region
  $region6: #{tpu_custom_call.1} parent=0 // pred_check
    _
  $region7: #{tpu_custom_call.1} parent=0 // pred_check_branch
    %11 = sbr.rel (0) target = $region9
  $region8: #{tpu_custom_call.1} parent=0 // pred_region
    _
  $region9: #{tpu_custom_call.1} parent=0 // pred_fallthru
    _
  // Predicated region
  $region10: #{tpu_custom_call.1} parent=0 // pred_check
    _
  $region11: #{tpu_custom_call.1} parent=0 // pred_check_branch
    %13 = sbr.rel (0) target = $region13
  $region12: #{tpu_custom_call.1} parent=0 // pred_region
    _
  $region13: #{tpu_custom_call.1} parent=0 // pred_fallthru
    _
  %v14 = vld [vmem:[%s0] sm:$0xff]
  %v15 = vld [vmem:[%s0 + $0x8] sm:$0xff]
  %v16 = vld [vmem:[%s0 + $0x10] sm:$0xff]
  %v17 = vld [vmem:[%s0 + $0x18] sm:$0xff]
  %v18 = vld [vmem:[%s0 + $0x20] sm:$0xff]
  %v19 = vld [vmem:[%s0 + $0x28] sm:$0xff]
  %v20 = vld [vmem:[%s0 + $0x30] sm:$0xff]
  %v21 = vld [vmem:[%s0 + $0x38] sm:$0xff]
  %vm22 = vcmask 130048
  %v23 = vsel %vm22, %v14, 0.0
  %24 = vadd.xlane.f32.xlu0 %v23
  %v25 = vpop.xlane.xlu0 %24
  %v26 = vsel %vm22, %v15, 0.0
  %27 = vadd.xlane.f32.xlu0 %v26
  %v28 = vpop.xlane.xlu0 %27
  %v29 = vsel %vm22, %v16, 0.0
  %30 = vadd.xlane.f32.xlu0 %v29
  %v31 = vpop.xlane.xlu0 %30
  %v32 = vsel %vm22, %v17, 0.0
  %33 = vadd.xlane.f32.xlu0 %v32
  %v34 = vpop.xlane.xlu0 %33
  %v35 = vsel %vm22, %v18, 0.0
  %36 = vadd.xlane.f32.xlu0 %v35
  %v37 = vpop.xlane.xlu0 %36
  %v38 = vsel %vm22, %v19, 0.0
  %39 = vadd.xlane.f32.xlu0 %v38
  %v40 = vpop.xlane.xlu0 %39
  %v41 = vsel %vm22, %v20, 0.0
  %42 = vadd.xlane.f32.xlu0 %v41
  %v43 = vpop.xlane.xlu0 %42
  %v44 = vsel %vm22, %v21, 0.0
  %45 = vadd.xlane.f32.xlu0 %v44
  %v46 = vpop.xlane.xlu0 %45
  %v47 = vrcp.pop 16.0
  %v48 = vmul.f32 %v25, %v47
  %v49 = vmul.f32 %v28, %v47
  %v50 = vmul.f32 %v31, %v47
  %v51 = vmul.f32 %v34, %v47
  %v52 = vmul.f32 %v37, %v47
  %v53 = vmul.f32 %v40, %v47
  %v54 = vmul.f32 %v43, %v47
  %v55 = vmul.f32 %v46, %v47
  %v56 = vsub.f32 %v14, %v48
  %v57 = vsub.f32 %v15, %v49
  %v58 = vsub.f32 %v16, %v50
  %v59 = vsub.f32 %v17, %v51
  %v60 = vsub.f32 %v18, %v52
  %v61 = vsub.f32 %v19, %v53
  %v62 = vsub.f32 %v20, %v54
  %v63 = vsub.f32 %v21, %v55
  %v64 = vmul.f32 %v56, %v56
  %v65 = vmul.f32 %v57, %v57
  %v66 = vmul.f32 %v58, %v58
  %v67 = vmul.f32 %v59, %v59
  %v68 = vmul.f32 %v60, %v60
  %v69 = vmul.f32 %v61, %v61
  %v70 = vmul.f32 %v62, %v62
  %v71 = vmul.f32 %v63, %v63
  %v72 = vsel %vm22, %v64, 0.0
  %73 = vadd.xlane.f32.xlu0 %v72
  %v74 = vpop.xlane.xlu0 %73
  %v75 = vsel %vm22, %v65, 0.0
  %76 = vadd.xlane.f32.xlu0 %v75
  %v77 = vpop.xlane.xlu0 %76
  %v78 = vsel %vm22, %v66, 0.0
  %79 = vadd.xlane.f32.xlu0 %v78
  %v80 = vpop.xlane.xlu0 %79
  %v81 = vsel %vm22, %v67, 0.0
  %82 = vadd.xlane.f32.xlu0 %v81
  %v83 = vpop.xlane.xlu0 %82
  %v84 = vsel %vm22, %v68, 0.0
  %85 = vadd.xlane.f32.xlu0 %v84
  %v86 = vpop.xlane.xlu0 %85
  %v87 = vsel %vm22, %v69, 0.0
  %88 = vadd.xlane.f32.xlu0 %v87
  %v89 = vpop.xlane.xlu0 %88
  %v90 = vsel %vm22, %v70, 0.0
  %91 = vadd.xlane.f32.xlu0 %v90
  %v92 = vpop.xlane.xlu0 %91
  %v93 = vsel %vm22, %v71, 0.0
  %94 = vadd.xlane.f32.xlu0 %v93
  %v95 = vpop.xlane.xlu0 %94
  %v96 = vmul.f32 %v74, %v47
  %v97 = vmul.f32 %v77, %v47
  %v98 = vmul.f32 %v80, %v47
  %v99 = vmul.f32 %v83, %v47
  %v100 = vmul.f32 %v86, %v47
  %v101 = vmul.f32 %v89, %v47
  %v102 = vmul.f32 %v92, %v47
  %v103 = vmul.f32 %v95, %v47
  %v104 = vadd.f32 %v96, 1e-05
  %v105 = vadd.f32 %v97, 1e-05
  %v106 = vadd.f32 %v98, 1e-05
  %v107 = vadd.f32 %v99, 1e-05
  %v108 = vadd.f32 %v100, 1e-05
  %v109 = vadd.f32 %v101, 1e-05
  %v110 = vadd.f32 %v102, 1e-05
  %v111 = vadd.f32 %v103, 1e-05
  %v112 = vrsqrt.pop %v104
  %v113 = vrsqrt.pop %v105
  %v114 = vrsqrt.pop %v106
  %v115 = vrsqrt.pop %v107
  %v116 = vrsqrt.pop %v108
  %v117 = vrsqrt.pop %v109
  %v118 = vrsqrt.pop %v110
  %v119 = vrsqrt.pop %v111
  %v120 = vmul.f32 %v56, %v112
  %v121 = vmul.f32 %v57, %v113
  %v122 = vmul.f32 %v58, %v114
  %v123 = vmul.f32 %v59, %v115
  %v124 = vmul.f32 %v60, %v116
  %v125 = vmul.f32 %v61, %v117
  %v126 = vmul.f32 %v62, %v118
  %v127 = vmul.f32 %v63, %v119
  %v128 = vld [vmem:[%s1] sm:$0xff]
  %v129 = vld [vmem:[%s1 + $0x8] sm:$0xff]
  %v130 = vld [vmem:[%s2] sm:$0x1]
  %v132 = vlaneseq
  %v133 = vshrl.u32 %v132, 7
  %v134 = vsub.s32 0, %v133
  %v135 = vrot.slane %v130, %v134
  %v138 = vsel %vm22, %v120, 0
  %v141 = vsel %vm22, %v121, 0
  %v144 = vsel %vm22, %v122, 0
  %v147 = vsel %vm22, %v123, 0
  %v150 = vsel %vm22, %v124, 0
  %v153 = vsel %vm22, %v125, 0
  %v156 = vsel %vm22, %v126, 0
  %v159 = vsel %vm22, %v127, 0
  %161 = vmatprep.subr.mxu0 0.0
  %162 = vmatpush1.msra.mxu0 %v128
  %163 = vmatprep.subr.mxu0 0.0
  %164 = vmatpush1.msra.mxu0 %v129
  %165 = vmatprep.subr.mxu0 0.0
  %166 = vmatpush1.msra.mxu0 0.0
  %167 = vmatprep.subr.mxu0 0.0
  %168 = vmatpush1.msra.mxu0 0.0
  %169 = vmatprep.subr.mxu0 0.0
  %170 = vmatpush1.msra.mxu0 0.0
  %171 = vmatprep.subr.mxu0 0.0
  %172 = vmatpush1.msra.mxu0 0.0
  %173 = vmatprep.subr.mxu0 0.0
  %174 = vmatpush1.msra.mxu0 0.0
  %175 = vmatprep.subr.mxu0 0.0
  %176 = vmatpush1.msra.mxu0 0.0
  %177 = vmatprep.subr.mxu0 0.0
  %178 = vmatpush1.msra.mxu0 0.0
  %179 = vmatprep.subr.mxu0 0.0
  %180 = vmatpush1.msra.mxu0 0.0
  %181 = vmatprep.subr.mxu0 0.0
  %182 = vmatpush1.msra.mxu0 0.0
  %183 = vmatprep.subr.mxu0 0.0
  %184 = vmatpush1.msra.mxu0 0.0
  %185 = vmatprep.subr.mxu0 0.0
  %186 = vmatpush1.msra.mxu0 0.0
  %187 = vmatprep.subr.mxu0 0.0
  %188 = vmatpush1.msra.mxu0 0.0
  %189 = vmatprep.subr.mxu0 0.0
  %190 = vmatpush1.msra.mxu0 0.0
  %191 = vmatprep.subr.mxu0 0.0
  %192 = vmatpush1.msra.mxu0 0.0
  %193 = vmatprep.subr.mxu0 0.0
  %194 = vmatpush1.msra.mxu0 0.0
  %195 = vmatprep.subr.mxu0 0.0
  %196 = vmatpush1.msra.mxu0 0.0
  %197 = vmatprep.subr.mxu0 0.0
  %198 = vmatpush1.msra.mxu0 0.0
  %199 = vmatprep.subr.mxu0 0.0
  %200 = vmatpush1.msra.mxu0 0.0
  %201 = vmatprep.subr.mxu0 0.0
  %202 = vmatpush1.msra.mxu0 0.0
  %203 = vmatprep.subr.mxu0 0.0
  %204 = vmatpush1.msra.mxu0 0.0
  %205 = vmatprep.subr.mxu0 0.0
  %206 = vmatpush1.msra.mxu0 0.0
  %207 = vmatprep.subr.mxu0 0.0
  %208 = vmatpush1.msra.mxu0 0.0
  %209 = vmatprep.subr.mxu0 0.0
  %210 = vmatpush1.msra.mxu0 0.0
  %211 = vmatprep.subr.mxu0 0.0
  %212 = vmatpush1.msra.mxu0 0.0
  %213 = vmatprep.subr.mxu0 0.0
  %214 = vmatpush1.msra.mxu0 0.0
  %215 = vmatprep.subr.mxu0 0.0
  %216 = vmatpush1.msra.mxu0 0.0
  %217 = vmatprep.subr.mxu0 0.0
  %218 = vmatpush1.msra.mxu0 0.0
  %219 = vmatprep.subr.mxu0 0.0
  %220 = vmatpush1.msra.mxu0 0.0
  %221 = vmatprep.subr.mxu0 0.0
  %222 = vmatpush1.msra.mxu0 0.0
  %223 = vmatprep.subr.mxu0 0.0
  %224 = vmatpush1.msra.mxu0 0.0
  %225 = vmatprep.mubr.f32.mxu0 0.0
  %226 = vmatmul.mubr.f32.gmra.mrb[0].mxu0 %v138
  %v227 = vpop.f32.mrb[0].mxu0
  %v228 = vadd.f32 %v135, %v227
  %v229 = vpop.f32.mrb[0].mxu0
  %230 = vmatprep.mubr.f32.mxu0 0.0
  %231 = vmatmul.mubr.f32.gmra.mrb[0].mxu0 %v141
  %v232 = vpop.f32.mrb[0].mxu0
  %v233 = vadd.f32 %v135, %v232
  %v234 = vpop.f32.mrb[0].mxu0
  %235 = vmatprep.mubr.f32.mxu0 0.0
  %236 = vmatmul.mubr.f32.gmra.mrb[0].mxu0 %v144
  %v237 = vpop.f32.mrb[0].mxu0
  %v238 = vadd.f32 %v135, %v237
  %v239 = vpop.f32.mrb[0].mxu0
  %240 = vmatprep.mubr.f32.mxu0 0.0
  %241 = vmatmul.mubr.f32.gmra.mrb[0].mxu0 %v147
  %v242 = vpop.f32.mrb[0].mxu0
  %v243 = vadd.f32 %v135, %v242
  %v244 = vpop.f32.mrb[0].mxu0
  %245 = vmatprep.mubr.f32.mxu0 0.0
  %246 = vmatmul.mubr.f32.gmra.mrb[0].mxu0 %v150
  %v247 = vpop.f32.mrb[0].mxu0
  %v248 = vadd.f32 %v135, %v247
  %v249 = vpop.f32.mrb[0].mxu0
  %250 = vmatprep.mubr.f32.mxu0 0.0
  %251 = vmatmul.mubr.f32.gmra.mrb[0].mxu0 %v153
  %v252 = vpop.f32.mrb[0].mxu0
  %v253 = vadd.f32 %v135, %v252
  %v254 = vpop.f32.mrb[0].mxu0
  %255 = vmatprep.mubr.f32.mxu0 0.0
  %256 = vmatmul.mubr.f32.gmra.mrb[0].mxu0 %v156
  %v257 = vpop.f32.mrb[0].mxu0
  %v258 = vadd.f32 %v135, %v257
  %v259 = vpop.f32.mrb[0].mxu0
  %260 = vmatprep.mubr.f32.mxu0 0.0
  %261 = vmatmul.mubr.f32.gmra.mrb[0].mxu0 %v159
  %v262 = vpop.f32.mrb[0].mxu0
  %v263 = vadd.f32 %v135, %v262
  %v264 = vpop.f32.mrb[0].mxu0
  %265 = vdwg.mxu0
  %v266 = vpack.c.bf16 %v233, %v228
  %v267 = vpack.c.bf16 %v243, %v238
  %v268 = vpack.c.bf16 %v253, %v248
  %v269 = vpack.c.bf16 %v263, %v258
  %v274 = vunpack.c.l.b16 %v266
  %v275 = vunpack.c.h.b16 %v266
  %v276 = vunpack.c.l.b16 %v267
  %v277 = vunpack.c.h.b16 %v267
  %v278 = vunpack.c.l.b16 %v268
  %v279 = vunpack.c.h.b16 %v268
  %v280 = vunpack.c.l.b16 %v269
  %v281 = vunpack.c.h.b16 %v269
  %v282 = vpack.c.b16 %v274, %v274
  %v283 = vpack.c.b16 %v275, %v275
  %v284 = vpack.c.b16 %v276, %v276
  %v285 = vpack.c.b16 %v277, %v277
  %v286 = vpack.c.b16 %v278, %v278
  %v287 = vpack.c.b16 %v279, %v279
  %v288 = vpack.c.b16 %v280, %v280
  %v289 = vpack.c.b16 %v281, %v281
  %vm298 = vcmask 257024
  %299 = vst.msk [vmem:[%s3] sm:$0xf] %vm298, %v282
  %300 = vst.msk [vmem:[%s3 + $0x4] sm:$0xf] %vm298, %v283
  %301 = vst.msk [vmem:[%s3 + $0x8] sm:$0xf] %vm298, %v284
  %302 = vst.msk [vmem:[%s3 + $0xc] sm:$0xf] %vm298, %v285
  %303 = vst.msk [vmem:[%s3 + $0x10] sm:$0xf] %vm298, %v286
  %304 = vst.msk [vmem:[%s3 + $0x14] sm:$0xf] %vm298, %v287
  %305 = vst.msk [vmem:[%s3 + $0x18] sm:$0xf] %vm298, %v288
  %306 = vst.msk [vmem:[%s3 + $0x1c] sm:$0xf] %vm298, %v289
  // Predicated region
  $region14: #{tpu_custom_call.1} parent=0 // pred_check
    _
  $region15: #{tpu_custom_call.1} parent=0 // pred_check_branch
    %308 = sbr.rel (0) target = $region17
  $region16: #{tpu_custom_call.1} parent=0 // pred_region
    _
  $region17: #{tpu_custom_call.1} parent=0 // pred_fallthru
    _
  // Predicated region
  $region18: #{tpu_custom_call.1} parent=0 // pred_check
    _
  $region19: #{tpu_custom_call.1} parent=0 // pred_check_branch
    %310 = sbr.rel (0) target = $region21
  $region20: #{tpu_custom_call.1} parent=0 // pred_region
    _
  $region21: #{tpu_custom_call.1} parent=0 // pred_fallthru
    _

</llo_original>
